<compile_context>
chip_gen: v6e
topology: v6e:2x2x1
jax: 0.10.0
libtpu: 0.0.40
codegen_flags: <defaults>
</compile_context>

<pallas_src>
import functools

import jax
import jax.numpy as jnp
from jax.experimental import pallas as pl
from jax.experimental.pallas import tpu as pltpu

BN_EPS = 1e-5


# ----------------------------------------------------------------------------
# Pass 1: conv-as-matmul (lane-dense, transposed) + per-channel sum / sumsq.
# ----------------------------------------------------------------------------
def _conv_stats_kernel(w_ref, p_ref, y_ref, sum_ref, sumsq_ref):
    # (Cout_pad, K_pad) @ (K_pad, tile_m) -> (Cout_pad, tile_m), f32 accumulation.
    y = jnp.dot(w_ref[...], p_ref[...], preferred_element_type=jnp.float32)
    y_ref[...] = y
    # Single-pass BN statistics: per-channel partial sums over this M tile.
    # Cross-lane reductions go to the XLU slot and overlap with MXU work.
    sum_ref[0] = jnp.sum(y, axis=1, keepdims=True)
    sumsq_ref[0] = jnp.sum(y * y, axis=1, keepdims=True)


# ----------------------------------------------------------------------------
# Pass 2: y * scale + shift (folded BatchNorm) followed by Mish.
# ----------------------------------------------------------------------------
def _bn_mish_kernel(y_ref, scale_ref, shift_ref, o_ref):
    x = y_ref[...] * scale_ref[...] + shift_ref[...]
    # Mish(x) = x * tanh(softplus(x)) = x * e(e+2) / (e(e+2)+2), e = exp(x).
    # One exp on the EUP + one approx reciprocal refined by a Newton step on the
    # VPU, instead of exp + log + tanh (3 serialized EUP transcendentals).
    xc = jnp.minimum(x, 20.0)          # overflow guard; for x > 20, mish(x) == x in f32
    e = jnp.exp(xc)
    num = e * (e + 2.0)
    den = num + 2.0                    # den >= 2, reciprocal is safe
    r = pl.reciprocal(den, approx=True)
    r = r * (2.0 - den * r)            # one Newton-Raphson step -> ~f32 accuracy
    mish = jnp.where(x > 20.0, x, x * (num * r))
    o_ref[...] = mish.astype(o_ref.dtype)


# ----------------------------------------------------------------------------
# Plain-JAX glue.
# ----------------------------------------------------------------------------
def _im2col_transposed(x_nchw, k, stride, pad):
    """Patches in (K, M) layout: K = kh*kw*Cin (Cin fastest), M = N*Ho*Wo."""
    N, C, H, W = x_nchw.shape
    x_nhwc = jnp.transpose(x_nchw, (0, 2, 3, 1))
    xp = jnp.pad(x_nhwc, ((0, 0), (pad, pad), (pad, pad), (0, 0)))
    Ho = (H + 2 * pad - k) // stride + 1
    Wo = (W + 2 * pad - k) // stride + 1
    cols = []
    for di in range(k):
        for dj in range(k):
            cols.append(xp[:, di:di + Ho * stride:stride, dj:dj + Wo * stride:stride, :])
    patches = jnp.stack(cols, axis=0)                  # (k*k, N, Ho, Wo, Cin)
    patches = jnp.transpose(patches, (0, 4, 1, 2, 3))  # (k*k, Cin, N, Ho, Wo)
    return patches.reshape(k * k * C, N * Ho * Wo), Ho, Wo


def _round_up(a, b):
    return (a + b - 1) // b * b


@functools.partial(jax.jit,
                   static_argnames=("stride", "padding", "tile_m", "compute_dtype"))
def cnn_block(x_nchw, weight, bias, gamma, beta, *, stride=1, padding=1,
              tile_m=512, compute_dtype=jnp.float32):
    """x: (N, Cin, H, W); weight: (Cout, Cin, k, k) -> (N, Cout, Ho, Wo)."""
    del bias  # per-channel conv bias cancels exactly under BN's mean subtraction
    N, Cin, H, W = x_nchw.shape
    Cout, _, k, _ = weight.shape

    patches_T, Ho, Wo = _im2col_transposed(x_nchw, k, stride, padding)
    K, M = patches_T.shape

    # TPU-friendly padding: K/Cout to sublane multiples, M to a multiple of the
    # tile. The tile is kept a multiple of 128 (lane-dense, unmasked stores) and
    # clamped to the 128-rounded problem size so tiny inputs are not over-padded.
    K_pad = _round_up(K, 8)
    C_pad = _round_up(Cout, 8)
    tile = max(128, (tile_m // 128) * 128)
    tile = min(tile, _round_up(M, 128))
    M_pad = _round_up(M, tile)
    T = M_pad // tile

    patches_T = jnp.pad(patches_T, ((0, K_pad - K), (0, M_pad - M))).astype(compute_dtype)
    # (Cout, Cin, kh, kw) -> (Cout, kh, kw, Cin) -> (Cout, K): matches patch K ordering.
    w_T = jnp.transpose(weight, (0, 2, 3, 1)).reshape(Cout, K)
    w_T = jnp.pad(w_T, ((0, C_pad - Cout), (0, K_pad - K))).astype(compute_dtype)

    # For very large layers, shrink tile_m or use compute_dtype=bf16 to keep
    # 2*(K_pad + C_pad)*tile*itemsize under the scoped VMEM limit (raise it via
    # pltpu.CompilerParams(vmem_limit_bytes=...) if needed).
    par = pltpu.CompilerParams(dimension_semantics=("parallel",))

    # ---- Pass 1: tiled conv matmul + per-tile per-channel sum / sumsq ----
    y_T, psum, psumsq = pl.pallas_call(
        _conv_stats_kernel,
        grid=(T,),
        in_specs=[
            pl.BlockSpec((C_pad, K_pad), lambda i: (0, 0)),    # weights (resident)
            pl.BlockSpec((K_pad, tile), lambda i: (0, i)),     # patch tile
        ],
        out_specs=(
            pl.BlockSpec((C_pad, tile), lambda i: (0, i)),     # conv output tile
            pl.BlockSpec((1, C_pad, 1), lambda i: (i, 0, 0)),  # partial sum
            pl.BlockSpec((1, C_pad, 1), lambda i: (i, 0, 0)),  # partial sumsq
        ),
        out_shape=(
            jax.ShapeDtypeStruct((C_pad, M_pad), jnp.float32),
            jax.ShapeDtypeStruct((T, C_pad, 1), jnp.float32),
            jax.ShapeDtypeStruct((T, C_pad, 1), jnp.float32),
        ),
        compiler_params=par,
    )(w_T, patches_T)

    # ---- Tiny per-channel finalize (Cout scalars): fold BN into scale/shift ----
    count = float(M)                                  # real pixel count (padding adds zeros)
    s = jnp.sum(psum[:, :, 0], axis=0)                # (C_pad,)
    ss = jnp.sum(psumsq[:, :, 0], axis=0)
    mean = s / count
    var = jnp.maximum(ss / count - mean * mean, 0.0)  # f32, clamped: no negative variance
    g = jnp.pad(gamma, (0, C_pad - Cout))
    b = jnp.pad(beta, (0, C_pad - Cout))
    inv_std = jax.lax.rsqrt(var + BN_EPS)
    scale = (g * inv_std).reshape(C_pad, 1).astype(jnp.float32)
    shift = (b - mean * g * inv_std).reshape(C_pad, 1).astype(jnp.float32)

    # ---- Pass 2: tiled normalize + affine + Mish (lane-dense elementwise) ----
    # Writes in place over the conv intermediate (input_output_aliases) so no
    # extra HBM output slab is allocated.
    out_T = pl.pallas_call(
        _bn_mish_kernel,
        grid=(T,),
        in_specs=[
            pl.BlockSpec((C_pad, tile), lambda i: (0, i)),
            pl.BlockSpec((C_pad, 1), lambda i: (0, 0)),
            pl.BlockSpec((C_pad, 1), lambda i: (0, 0)),
        ],
        out_specs=pl.BlockSpec((C_pad, tile), lambda i: (0, i)),
        out_shape=jax.ShapeDtypeStruct((C_pad, M_pad), jnp.float32),
        input_output_aliases={0: 0},
        compiler_params=par,
    )(y_T, scale, shift)

    out = out_T[:Cout, :M].reshape(Cout, N, Ho, Wo)
    return jnp.transpose(out, (1, 0, 2, 3))           # back to NCHW


def _reference(x_nchw, weight, bias, gamma, beta, *, stride=1, padding=1):
    # Pure-JAX reference mirroring the PyTorch module (training-mode BN).
    y = jax.lax.conv_general_dilated(
        x_nchw, weight, window_strides=(stride, stride),
        padding=[(padding, padding), (padding, padding)],
        dimension_numbers=("NCHW", "OIHW", "NCHW"),
    ) + bias[None, :, None, None]
    mean = jnp.mean(y, axis=(0, 2, 3), keepdims=True)
    var = jnp.mean((y - mean) ** 2, axis=(0, 2, 3), keepdims=True)
    y_bn = (y - mean) * jax.lax.rsqrt(var + BN_EPS)
    y_bn = y_bn * gamma[None, :, None, None] + beta[None, :, None, None]
    return y_bn * jnp.tanh(jax.nn.softplus(y_bn))


if __name__ == "__main__":
    # Small shapes consistent with CNNBlock(in_channels=4, out_channels=8,
    #                                       kernel_size=3, stride=1, padding=1)
    N, Cin, H, W = 2, 4, 16, 16
    Cout, k = 8, 3

    key = jax.random.PRNGKey(0)
    kx, kw, kb = jax.random.split(key, 3)
    x = jax.random.normal(kx, (N, Cin, H, W), dtype=jnp.float32)
    weight = jax.random.normal(kw, (Cout, Cin, k, k), dtype=jnp.float32) * 0.1
    bias = jax.random.normal(kb, (Cout,), dtype=jnp.float32) * 0.1
    gamma = jnp.ones((Cout,), dtype=jnp.float32)   # nn.BatchNorm2d default init
    beta = jnp.zeros((Cout,), dtype=jnp.float32)

    # f32 end-to-end run: tile_m=256 -> a 2-step grid over M = 512.
    out = cnn_block(x, weight, bias, gamma, beta, stride=1, padding=1,
                    tile_m=256, compute_dtype=jnp.float32)
    out = jax.block_until_ready(out)

    ref = _reference(x, weight, bias, gamma, beta, stride=1, padding=1)
    assert out.shape == (N, Cout, H, W)
    assert jnp.allclose(out, ref, atol=1e-4, rtol=1e-4), "mismatch vs reference"

    # bf16 MXU-input path (recommended on v6e/v7x): sanity-check it runs clean.
    out_bf16 = jax.block_until_ready(
        cnn_block(x, weight, bias, gamma, beta, stride=1, padding=1,
                  tile_m=256, compute_dtype=jnp.bfloat16))
    assert out_bf16.shape == (N, Cout, H, W)
    assert bool(jnp.isfinite(out_bf16).all())

    print("KERNEL_OK")
</pallas_src>

<mosaic_0001>
module attributes {stable_mosaic.version = 11 : i64} {
  func.func @_conv_stats_kernel(%arg0: i32, %arg1: memref<8x40xf32, #tpu.memory_space<vmem>>, %arg2: memref<40x256xf32, #tpu.memory_space<vmem>>, %arg3: memref<8x256xf32, #tpu.memory_space<vmem>>, %arg4: memref<1x8x1xf32, #tpu.memory_space<vmem>>, %arg5: memref<1x8x1xf32, #tpu.memory_space<vmem>>) attributes {dimension_semantics = [#tpu.dimension_semantics<parallel>], iteration_bounds = array<i64: 2>, scalar_prefetch = 0 : i64, scratch_operands = 0 : i64, tpu.core_type = #tpu.core_type<tc>, window_params = [{pipeline_mode = #tpu.pipeline_mode<synchronous>, transform_indices = @transform_0, window_bounds = array<i64: 8, 40>}, {transform_indices = @transform_1, window_bounds = array<i64: 40, 256>}, {transform_indices = @transform_2, window_bounds = array<i64: 8, 256>}, {transform_indices = @transform_3, window_bounds = array<i64: 1, 8, 1>}, {transform_indices = @transform_4, window_bounds = array<i64: 1, 8, 1>}]} {
    %c0 = arith.constant 0 : index
    %c0_0 = arith.constant 0 : index
    %0 = vector.load %arg1[%c0, %c0_0] : memref<8x40xf32, #tpu.memory_space<vmem>>, vector<8x40xf32>
    %c0_1 = arith.constant 0 : index
    %c0_2 = arith.constant 0 : index
    %1 = vector.load %arg2[%c0_1, %c0_2] : memref<40x256xf32, #tpu.memory_space<vmem>>, vector<40x256xf32>
    %cst = arith.constant dense<0.000000e+00> : vector<8x256xf32>
    %2 = tpu.matmul %0, %1, %cst {dimension_numbers = #tpu.dot_dimension_numbers<[1], [0], [0], [1], [0, 0, 1, 1], [], []>} : vector<8x40xf32>, vector<40x256xf32>, vector<8x256xf32> -> vector<8x256xf32>
    %c0_3 = arith.constant 0 : index
    %c0_4 = arith.constant 0 : index
    %3 = vector.load %arg3[%c0_3, %c0_4] : memref<8x256xf32, #tpu.memory_space<vmem>>, vector<8x256xf32>
    tpu.vector_store %arg3[%c0_3, %c0_4], %2 {strides = array<i32>} : memref<8x256xf32, #tpu.memory_space<vmem>>, vector<8x256xf32>,
    %cst_5 = arith.constant dense<0.000000e+00> : vector<8xf32>
    %4 = vector.multi_reduction <add>, %2, %cst_5 [1] : vector<8x256xf32> to vector<8xf32>
    %5 = vector.shape_cast %4 : vector<8xf32> to vector<8x1xf32>
    %c0_6 = arith.constant 0 : index
    %c0_7 = arith.constant 0 : index
    %c0_8 = arith.constant 0 : index
    %6 = vector.load %arg4[%c0_6, %c0_7, %c0_8] : memref<1x8x1xf32, #tpu.memory_space<vmem>>, vector<1x8x1xf32>
    %7 = vector.shape_cast %6 : vector<1x8x1xf32> to vector<8x1xf32>
    %8 = vector.shape_cast %5 : vector<8x1xf32> to vector<1x8x1xf32>
    tpu.vector_store %arg4[%c0_6, %c0_7, %c0_8], %8 {strides = array<i32>} : memref<1x8x1xf32, #tpu.memory_space<vmem>>, vector<1x8x1xf32>,
    %9 = arith.mulf %2, %2 : vector<8x256xf32>
    %cst_9 = arith.constant dense<0.000000e+00> : vector<8xf32>
    %10 = vector.multi_reduction <add>, %9, %cst_9 [1] : vector<8x256xf32> to vector<8xf32>
    %11 = vector.shape_cast %10 : vector<8xf32> to vector<8x1xf32>
    %c0_10 = arith.constant 0 : index
    %c0_11 = arith.constant 0 : index
    %c0_12 = arith.constant 0 : index
    %12 = vector.load %arg5[%c0_10, %c0_11, %c0_12] : memref<1x8x1xf32, #tpu.memory_space<vmem>>, vector<1x8x1xf32>
    %13 = vector.shape_cast %12 : vector<1x8x1xf32> to vector<8x1xf32>
    %14 = vector.shape_cast %11 : vector<8x1xf32> to vector<1x8x1xf32>
    tpu.vector_store %arg5[%c0_10, %c0_11, %c0_12], %14 {strides = array<i32>} : memref<1x8x1xf32, #tpu.memory_space<vmem>>, vector<1x8x1xf32>,
    return
  }
  func.func @transform_0(%arg0: i32) -> (i32, i32) {
    %c0_i32 = arith.constant 0 : i32
    %c0_i32_0 = arith.constant 0 : i32
    %c0_i32_1 = arith.constant 0 : i32
    return %c0_i32, %c0_i32_0 : i32, i32
  }
  func.func @transform_1(%arg0: i32) -> (i32, i32) {
    %c0_i32 = arith.constant 0 : i32
    %c0_i32_0 = arith.constant 0 : i32
    return %c0_i32, %arg0 : i32, i32
  }
  func.func @transform_2(%arg0: i32) -> (i32, i32) {
    %c0_i32 = arith.constant 0 : i32
    %c0_i32_0 = arith.constant 0 : i32
    return %c0_i32, %arg0 : i32, i32
  }
  func.func @transform_3(%arg0: i32) -> (i32, i32, i32) {
    %c0_i32 = arith.constant 0 : i32
    %c0_i32_0 = arith.constant 0 : i32
    %c0_i32_1 = arith.constant 0 : i32
    return %arg0, %c0_i32, %c0_i32_0 : i32, i32, i32
  }
  func.func @transform_4(%arg0: i32) -> (i32, i32, i32) {
    %c0_i32 = arith.constant 0 : i32
    %c0_i32_0 = arith.constant 0 : i32
    %c0_i32_1 = arith.constant 0 : i32
    return %arg0, %c0_i32, %c0_i32_0 : i32, i32, i32
  }
}

module attributes {stable_mosaic.version = 11 : i64} {
  func.func @_bn_mish_kernel(%arg0: i32, %arg1: memref<8x256xf32, #tpu.memory_space<vmem>>, %arg2: memref<8x1xf32, #tpu.memory_space<vmem>>, %arg3: memref<8x1xf32, #tpu.memory_space<vmem>>, %arg4: memref<8x256xf32, #tpu.memory_space<vmem>>) attributes {dimension_semantics = [#tpu.dimension_semantics<parallel>], iteration_bounds = array<i64: 2>, scalar_prefetch = 0 : i64, scratch_operands = 0 : i64, tpu.core_type = #tpu.core_type<tc>, window_params = [{transform_indices = @transform_0, window_bounds = array<i64: 8, 256>}, {pipeline_mode = #tpu.pipeline_mode<synchronous>, transform_indices = @transform_1, window_bounds = array<i64: 8, 1>}, {pipeline_mode = #tpu.pipeline_mode<synchronous>, transform_indices = @transform_2, window_bounds = array<i64: 8, 1>}, {transform_indices = @transform_3, window_bounds = array<i64: 8, 256>}]} {
    %c0 = arith.constant 0 : index
    %c0_0 = arith.constant 0 : index
    %0 = vector.load %arg1[%c0, %c0_0] : memref<8x256xf32, #tpu.memory_space<vmem>>, vector<8x256xf32>
    %c0_1 = arith.constant 0 : index
    %c0_2 = arith.constant 0 : index
    %1 = vector.load %arg2[%c0_1, %c0_2] : memref<8x1xf32, #tpu.memory_space<vmem>>, vector<8x1xf32>
    %2 = vector.broadcast %1 : vector<8x1xf32> to vector<8x256xf32>
    %3 = arith.mulf %0, %2 : vector<8x256xf32>
    %c0_3 = arith.constant 0 : index
    %c0_4 = arith.constant 0 : index
    %4 = vector.load %arg3[%c0_3, %c0_4] : memref<8x1xf32, #tpu.memory_space<vmem>>, vector<8x1xf32>
    %5 = vector.broadcast %4 : vector<8x1xf32> to vector<8x256xf32>
    %6 = arith.addf %3, %5 : vector<8x256xf32>
    %cst = arith.constant 2.000000e+01 : f32
    %7 = vector.broadcast %cst : f32 to vector<8x256xf32>
    %8 = arith.minimumf %6, %7 : vector<8x256xf32>
    %9 = math.exp %8 : vector<8x256xf32>
    %cst_5 = arith.constant 2.000000e+00 : f32
    %10 = vector.broadcast %cst_5 : f32 to vector<8x256xf32>
    %11 = arith.addf %9, %10 : vector<8x256xf32>
    %12 = arith.mulf %9, %11 : vector<8x256xf32>
    %cst_6 = arith.constant 2.000000e+00 : f32
    %13 = vector.broadcast %cst_6 : f32 to vector<8x256xf32>
    %14 = arith.addf %12, %13 : vector<8x256xf32>
    %15 = tpu.reciprocal %14 {approx = true} : vector<8x256xf32> -> vector<8x256xf32>
    %16 = arith.mulf %14, %15 : vector<8x256xf32>
    %cst_7 = arith.constant 2.000000e+00 : f32
    %17 = vector.broadcast %cst_7 : f32 to vector<8x256xf32>
    %18 = arith.subf %17, %16 : vector<8x256xf32>
    %19 = arith.mulf %15, %18 : vector<8x256xf32>
    %cst_8 = arith.constant 2.000000e+01 : f32
    %20 = vector.broadcast %cst_8 : f32 to vector<8x256xf32>
    %21 = arith.cmpf ogt, %6, %20 : vector<8x256xf32>
    %22 = arith.mulf %12, %19 : vector<8x256xf32>
    %23 = arith.mulf %6, %22 : vector<8x256xf32>
    %24 = arith.select %21, %6, %23 : vector<8x256xi1>, vector<8x256xf32>
    %c0_9 = arith.constant 0 : index
    %c0_10 = arith.constant 0 : index
    %25 = vector.load %arg4[%c0_9, %c0_10] : memref<8x256xf32, #tpu.memory_space<vmem>>, vector<8x256xf32>
    tpu.vector_store %arg4[%c0_9, %c0_10], %24 {strides = array<i32>} : memref<8x256xf32, #tpu.memory_space<vmem>>, vector<8x256xf32>,
    return
  }
  func.func @transform_0(%arg0: i32) -> (i32, i32) {
    %c0_i32 = arith.constant 0 : i32
    %c0_i32_0 = arith.constant 0 : i32
    return %c0_i32, %arg0 : i32, i32
  }
  func.func @transform_1(%arg0: i32) -> (i32, i32) {
    %c0_i32 = arith.constant 0 : i32
    %c0_i32_0 = arith.constant 0 : i32
    %c0_i32_1 = arith.constant 0 : i32
    return %c0_i32, %c0_i32_0 : i32, i32
  }
  func.func @transform_2(%arg0: i32) -> (i32, i32) {
    %c0_i32 = arith.constant 0 : i32
    %c0_i32_0 = arith.constant 0 : i32
    %c0_i32_1 = arith.constant 0 : i32
    return %c0_i32, %c0_i32_0 : i32, i32
  }
  func.func @transform_3(%arg0: i32) -> (i32, i32) {
    %c0_i32 = arith.constant 0 : i32
    %c0_i32_0 = arith.constant 0 : i32
    return %c0_i32, %arg0 : i32, i32
  }
}

</mosaic_0001>

<llo_original>
// kernel: cnn_block.3
$region0: #{cnn_block.3}
  #allocation0 [shape = 'u32[]', space=smem, size = 0x4, offset = 0x4, fixed_abs, tag = 'smem constant byte address 0x4 - core index']
  #allocation1 [shape = 'u32[144,128]{1,0:T(1,128)}', space=vmem, size = 0x12000, scoped, tag = 'internal scratch']
  %s0 = inlined_call_operand.vmem [shape: f32[8,512], index: 0, kind: input, shape index: {}, may-alias: {0,3}]
  %s1 = inlined_call_operand.vmem [shape: f32[8,1], index: 1, kind: input, shape index: {}]
  %s2 = inlined_call_operand.vmem [shape: f32[8,1], index: 2, kind: input, shape index: {}]
  %s3 = inlined_call_operand.vmem [shape: f32[8,512], index: 3, kind: output, shape index: {}, may-alias: {0,3}]
  %s4 = sld [smem:[#allocation0]]
  $region45: #{cnn_block.3} parent=0
    _
  %s6 = ssub.s32 1, %s4
  %s7 = scalar_select 0, %s6, %s4
  loop: start=0, step=1, limit=4
  $region2: #{cnn_block.3} parent=0 // loop_pre_header
    _
  $region3: #{cnn_block.3} parent=0 // loop_header
    %s9 = sphi 0, %s13
    %p10 = scmp.ge.s32.totalorder %s9, 4
    %s19 = sphi 0, %s21
    %s22 = sphi 0, %s19
    %s23 = sphi 0, %s22
    %s39 = sphi 0, %s23
    %s43 = sphi 0, %s43
    %s45 = sphi 0, %s43
    %s46 = sphi 0, %s45
    %s60 = sphi 0, %s46
    %s64 = sphi 0, %s64
    %s66 = sphi 0, %s64
    %s67 = sphi 0, %s66
    %s81 = sphi 0, %s67
    %s87 = sphi 0, %s89
    %s90 = sphi 0, %s87
    %s91 = sphi 0, %s90
    %s107 = sphi 0, %s91
  $region4: #{cnn_block.3} parent=0 // loop_header_branch
    %12 = sbr.rel (%p10) target = $region8
  $region5: #{cnn_block.3} parent=0 // loop_body
    %s14 = ssub.s32 %s9, 1
    %s15 = ssub.s32 %s9, 2
    %s16 = sadd.s32 %s9, 1
    %s17 = ssub.s32 %s9, %s16
    %p18 = scmp.eq.s32.totalorder %s17, 0
    %s20 = sadd.s32 %s19, 1
    %s21 = scalar_select %p18, %s19, %s20
    %p24 = pneg %p18
    %p25 = scmp.eq.s32.totalorder %s9, 1
    %p26 = por %p24, %p25
    %p27 = scmp.ne.s32.totalorder %s19, %s22
    %p28 = scmp.eq.s32.totalorder %s9, 0
    %p29 = por %p27, %p28
    %p30 = scmp.ne.s32.totalorder %s19, %s22
    %p31 = scmp.eq.s32.totalorder %s14, 1
    %p32 = por %p30, %p31
    %p33 = scmp.ne.s32.totalorder %s22, %s23
    %p34 = scmp.eq.s32.totalorder %s14, 0
    %p35 = por %p33, %p34
    %p36 = scmp.ne.s32.totalorder %s22, %s23
    %p37 = scmp.eq.s32.totalorder %s15, 1
    %p38 = por %p36, %p37
    %p40 = scmp.ne.s32.totalorder %s23, %s39
    %p41 = scmp.eq.s32.totalorder %s15, 0
    %p42 = por %p40, %p41
    %s44 = sadd.s32 %s43, 1
    %p47 = scmp.eq.s32.totalorder %s9, 1
    %p48 = scmp.ne.s32.totalorder %s43, %s45
    %p49 = scmp.eq.s32.totalorder %s9, 0
    %p50 = por %p48, %p49
    %p51 = scmp.ne.s32.totalorder %s43, %s45
    %p52 = scmp.eq.s32.totalorder %s14, 1
    %p53 = por %p51, %p52
    %p54 = scmp.ne.s32.totalorder %s45, %s46
    %p55 = scmp.eq.s32.totalorder %s14, 0
    %p56 = por %p54, %p55
    %p57 = scmp.ne.s32.totalorder %s45, %s46
    %p58 = scmp.eq.s32.totalorder %s15, 1
    %p59 = por %p57, %p58
    %p61 = scmp.ne.s32.totalorder %s46, %s60
    %p62 = scmp.eq.s32.totalorder %s15, 0
    %p63 = por %p61, %p62
    %s65 = sadd.s32 %s64, 1
    %p68 = scmp.eq.s32.totalorder %s9, 1
    %p69 = scmp.ne.s32.totalorder %s64, %s66
    %p70 = scmp.eq.s32.totalorder %s9, 0
    %p71 = por %p69, %p70
    %p72 = scmp.ne.s32.totalorder %s64, %s66
    %p73 = scmp.eq.s32.totalorder %s14, 1
    %p74 = por %p72, %p73
    %p75 = scmp.ne.s32.totalorder %s66, %s67
    %p76 = scmp.eq.s32.totalorder %s14, 0
    %p77 = por %p75, %p76
    %p78 = scmp.ne.s32.totalorder %s66, %s67
    %p79 = scmp.eq.s32.totalorder %s15, 1
    %p80 = por %p78, %p79
    %p82 = scmp.ne.s32.totalorder %s67, %s81
    %p83 = scmp.eq.s32.totalorder %s15, 0
    %p84 = por %p82, %p83
    %s85 = ssub.s32 %s9, %s16
    %p86 = scmp.eq.s32.totalorder %s85, 0
    %s88 = sadd.s32 %s87, 1
    %s89 = scalar_select %p86, %s87, %s88
    %p92 = pneg %p86
    %p93 = scmp.eq.s32.totalorder %s9, 1
    %p94 = por %p92, %p93
    %p95 = scmp.ne.s32.totalorder %s87, %s90
    %p96 = scmp.eq.s32.totalorder %s9, 0
    %p97 = por %p95, %p96
    %p98 = scmp.ne.s32.totalorder %s87, %s90
    %p99 = scmp.eq.s32.totalorder %s14, 1
    %p100 = por %p98, %p99
    %p101 = scmp.ne.s32.totalorder %s90, %s91
    %p102 = scmp.eq.s32.totalorder %s14, 0
    %p103 = por %p101, %p102
    %p104 = scmp.ne.s32.totalorder %s90, %s91
    %p105 = scmp.eq.s32.totalorder %s15, 1
    %p106 = por %p104, %p105
    %p108 = scmp.ne.s32.totalorder %s91, %s107
    %p109 = scmp.eq.s32.totalorder %s15, 0
    %p110 = por %p108, %p109
    %p111 = scmp.le.s32.totalorder 1, %s9
    %p112 = scmp.lt.s32.totalorder %s9, 3
    %p113 = pnand %p111, %p112
    %p114 = pneg %p113
    // Predicated region
    $region9: #{cnn_block.3} parent=5 // pred_check
      _
    $region10: #{cnn_block.3} parent=5 // pred_check_branch
      %116 = sbr.rel (%p113) target = $region12
    $region11: #{cnn_block.3} parent=5 // pred_region
      %s117 = ssub.s32 %s9, 1
      // Predicated region
      $region13: #{cnn_block.3} parent=11 // pred_check
        %p118 = pneg %p56
      $region14: #{cnn_block.3} parent=11 // pred_check_branch
        %120 = sbr.rel (%p118) target = $region16
      $region15: #{cnn_block.3} parent=11 // pred_region
        _
      $region16: #{cnn_block.3} parent=11 // pred_fallthru
        _
      // Predicated region
      $region17: #{cnn_block.3} parent=11 // pred_check
        %p121 = pneg %p77
      $region18: #{cnn_block.3} parent=11 // pred_check_branch
        %123 = sbr.rel (%p121) target = $region20
      $region19: #{cnn_block.3} parent=11 // pred_region
        _
      $region20: #{cnn_block.3} parent=11 // pred_fallthru
        _
    $region12: #{cnn_block.3} parent=5 // pred_fallthru
      _
    %p124 = scmp.lt.s32.totalorder %s9, 2
    // Predicated region
    $region21: #{cnn_block.3} parent=5 // pred_check
      %p125 = pneg %p124
    $region22: #{cnn_block.3} parent=5 // pred_check_branch
      %127 = sbr.rel (%p125) target = $region24
    $region23: #{cnn_block.3} parent=5 // pred_region
      // Predicated region
      $region25: #{cnn_block.3} parent=23 // pred_check
        %p128 = pneg %p29
      $region26: #{cnn_block.3} parent=23 // pred_check_branch
        %130 = sbr.rel (%p128) target = $region28
      $region27: #{cnn_block.3} parent=23 // pred_region
        %s131 = smul.u32 2, %s9
        %p132 = scmp.lt.s32.totalorder %s131, 3
        %s133 = scalar_select %p132, %s131, 3
        %s134 = smul.addr %s133, 8
        %s135 = scalar_lea.vmem %s0, %s134
        %s136 = smul.u32 2, %s9
      $region28: #{cnn_block.3} parent=23 // pred_fallthru
        _
    $region24: #{cnn_block.3} parent=5 // pred_fallthru
      _
    %p137 = scmp.le.s32.totalorder 1, %s9
    %p138 = scmp.lt.s32.totalorder %s9, 3
    %p139 = pnand %p137, %p138
    %p140 = pneg %p139
    // Predicated region
    $region29: #{cnn_block.3} parent=5 // pred_check
      _
    $region30: #{cnn_block.3} parent=5 // pred_check_branch
      %142 = sbr.rel (%p139) target = $region32
    $region31: #{cnn_block.3} parent=5 // pred_region
      %s143 = ssub.s32 %s9, 1
      %s144 = smul.u32 2, %s14
      %p145 = scmp.lt.s32.totalorder %s144, 3
      %s146 = scalar_select %p145, %s144, 3
      %s147 = smul.addr %s146, 8
      %s148 = scalar_lea.vmem %s0, %s147
      %p149 = pneg %p35
      %p150 = pneg %p32
      %p151 = pneg %p56
      %p152 = pneg %p53
      %p153 = pneg %p77
      %p154 = pneg %p74
      %p155 = pneg %p103
      %p156 = pneg %p100
      %s157 = smul.u32 2, %s14
      %p158 = scmp.lt.s32.totalorder %s157, 3
      %s159 = scalar_select %p158, %s157, 3
      %s160 = smul.addr %s159, 8
      %s161 = scalar_lea.vmem %s3, %s160
      %s162 = smul.u32 2, %s14
      %p163 = scmp.lt.s32.totalorder %s162, 3
      %s164 = scalar_select %p163, %s162, 3
      %s165 = smul.addr %s164, 8
      %s166 = scalar_lea.vmem %s0, %s165
      %s167 = smul.u32 2, %s14
      %s168 = smul.u32 2, %s14
      %p169 = scmp.lt.s32.totalorder %s168, 3
      %s170 = scalar_select %p169, %s168, 3
      %s171 = smul.addr %s170, 8
      %s172 = scalar_lea.vmem %s3, %s171
      %s173 = smul.u32 2, %s14
      %v174 = vld [vmem:[%s166] sm:$0xff]
      %v175 = vld [vmem:[%s166 + $0x8] sm:$0xff]
      %v176 = vld [vmem:[%s1] sm:$0xff]
      %178 = vset.pattern.permute.xlu0 0
      %179 = vperm.xlu0 %178, %v176
      %v180 = vpop.permute.xlu0 %179
      %v182 = vmul.f32 %v174, %v180
      %v183 = vmul.f32 %v175, %v180
      %v184 = vld [vmem:[%s2] sm:$0xff]
      %186 = vset.pattern.permute.xlu0 0
      %187 = vperm.xlu0 %186, %v184
      %v188 = vpop.permute.xlu0 %187
      %v190 = vadd.f32 %v182, %v188
      %v191 = vadd.f32 %v183, %v188
      %v192 = vmin.f32 %v190, 20.0
      %v193 = vmin.f32 %v191, 20.0
      %v194 = vmul.f32 %v192, 1.442695
      %v195 = vpow.pop %v194
      %v196 = vmul.f32 %v193, 1.442695
      %v197 = vpow.pop %v196
      %v198 = vadd.f32 %v195, 2.0
      %v199 = vadd.f32 %v197, 2.0
      %v200 = vmul.f32 %v195, %v198
      %v201 = vmul.f32 %v197, %v199
      %v202 = vadd.f32 %v200, 2.0
      %v203 = vadd.f32 %v201, 2.0
      %v204 = vrcp.pop %v202
      %v205 = vrcp.pop %v203
      %v206 = vmul.f32 %v202, %v204
      %v207 = vmul.f32 %v203, %v205
      %v208 = vsub.f32 2.0, %v206
      %v209 = vsub.f32 2.0, %v207
      %v210 = vmul.f32 %v204, %v208
      %v211 = vmul.f32 %v205, %v209
      %vm212 = vcmp.gt.f32.partialorder %v190, 20.0
      %vm213 = vcmp.gt.f32.partialorder %v191, 20.0
      %v214 = vmul.f32 %v200, %v210
      %v215 = vmul.f32 %v201, %v211
      %v216 = vmul.f32 %v190, %v214
      %v217 = vmul.f32 %v191, %v215
      %v218 = vsel %vm212, %v190, %v216
      %v219 = vsel %vm213, %v191, %v217
      %220 = vst [vmem:[%s172] sm:$0xff] %v218
      %221 = vst [vmem:[%s172 + $0x8] sm:$0xff] %v219
      %s222 = smul.u32 2, %s14
      %p223 = scmp.lt.s32.totalorder %s222, 3
      %s224 = scalar_select %p223, %s222, 3
      %s225 = smul.addr %s224, 8
      %s226 = scalar_lea.vmem %s3, %s225
      // Predicated region
      $region33: #{cnn_block.3} parent=31 // pred_check
        %p227 = pneg %p100
      $region34: #{cnn_block.3} parent=31 // pred_check_branch
        %229 = sbr.rel (%p227) target = $region36
      $region35: #{cnn_block.3} parent=31 // pred_region
        %s230 = smul.u32 2, %s14
      $region36: #{cnn_block.3} parent=31 // pred_fallthru
        _
    $region32: #{cnn_block.3} parent=5 // pred_fallthru
      _
    %p231 = scmp.le.s32.totalorder 2, %s9
    // Predicated region
    $region37: #{cnn_block.3} parent=5 // pred_check
      %p232 = pneg %p231
    $region38: #{cnn_block.3} parent=5 // pred_check_branch
      %234 = sbr.rel (%p232) target = $region40
    $region39: #{cnn_block.3} parent=5 // pred_region
      %s235 = ssub.s32 %s9, 2
      // Predicated region
      $region41: #{cnn_block.3} parent=39 // pred_check
        %p236 = pneg %p106
      $region42: #{cnn_block.3} parent=39 // pred_check_branch
        %238 = sbr.rel (%p236) target = $region44
      $region43: #{cnn_block.3} parent=39 // pred_region
        %s239 = smul.u32 2, %s15
        %p240 = scmp.lt.s32.totalorder %s239, 3
        %s241 = scalar_select %p240, %s239, 3
        %s242 = smul.addr %s241, 8
        %s243 = scalar_lea.vmem %s3, %s242
      $region44: #{cnn_block.3} parent=39 // pred_fallthru
        _
    $region40: #{cnn_block.3} parent=5 // pred_fallthru
      _
  $region6: #{cnn_block.3} parent=0 // loop_footer
    %s13 = sadd.s32 1, %s9
  $region7: #{cnn_block.3} parent=0 // loop_footer_branch
    %8 = sbr.rel target = $region3
  $region8: #{cnn_block.3} parent=0 // loop_exit
    _

// kernel: cnn_block.2
$region0: #{cnn_block.2}
  #allocation0 [shape = 'u32[]', space=smem, size = 0x4, offset = 0x4, fixed_abs, tag = 'smem constant byte address 0x4 - core index']
  #allocation1 [shape = 'u32[144,128]{1,0:T(1,128)}', space=vmem, size = 0x12000, scoped, tag = 'internal scratch']
  %s0 = inlined_call_operand.vmem [shape: f32[8,40], index: 0, kind: input, shape index: {}]
  %s1 = inlined_call_operand.vmem [shape: f32[40,512], index: 1, kind: input, shape index: {}]
  %s2 = inlined_call_operand.vmem [shape: f32[8,512], index: 2, kind: output, shape index: {0}]
  %s3 = inlined_call_operand.vmem [shape: f32[2,8,1], index: 3, kind: output, shape index: {1}]
  %s4 = inlined_call_operand.vmem [shape: f32[2,8,1], index: 4, kind: output, shape index: {2}]
  %5 = xla_tuple %s2, %s3, %s4
  %s6 = sld [smem:[#allocation0]]
  $region80: #{cnn_block.2} parent=0
    _
  %s8 = ssub.s32 1, %s6
  %s9 = scalar_select 0, %s8, %s6
  $region1: #{cnn_block.2} parent=0
    #allocation2 [shape = 'u8[81920]{0}', space=vmem, size = 0x14000, scoped, tag = 'input window, operand 1']
    loop: start=0, step=1, limit=4
    $region2: #{cnn_block.2} parent=1 // loop_pre_header
      _
    $region3: #{cnn_block.2} parent=1 // loop_header
      %s11 = sphi 0, %s15
      %p12 = scmp.ge.s32.totalorder %s11, 4
      %s19 = sphi 0, %s19
      %s21 = sphi 0, %s19
      %s22 = sphi 0, %s21
      %s36 = sphi 0, %s22
      %s42 = sphi 0, %s44
      %s45 = sphi 0, %s42
      %s46 = sphi 0, %s45
      %s62 = sphi 0, %s46
      %s68 = sphi 0, %s70
      %s71 = sphi 0, %s68
      %s72 = sphi 0, %s71
      %s88 = sphi 0, %s72
      %s94 = sphi 0, %s96
      %s97 = sphi 0, %s94
      %s98 = sphi 0, %s97
      %s114 = sphi 0, %s98
      %s120 = sphi 0, %s122
      %s123 = sphi 0, %s120
      %s124 = sphi 0, %s123
      %s140 = sphi 0, %s124
    $region4: #{cnn_block.2} parent=1 // loop_header_branch
      %14 = sbr.rel (%p12) target = $region8
    $region5: #{cnn_block.2} parent=1 // loop_body
      %s16 = ssub.s32 %s11, 1
      %s17 = ssub.s32 %s11, 2
      %s18 = sadd.s32 %s11, 1
      %s20 = sadd.s32 %s19, 1
      %p23 = scmp.eq.s32.totalorder %s11, 1
      %p24 = scmp.ne.s32.totalorder %s19, %s21
      %p25 = scmp.eq.s32.totalorder %s11, 0
      %p26 = por %p24, %p25
      %p27 = scmp.ne.s32.totalorder %s19, %s21
      %p28 = scmp.eq.s32.totalorder %s16, 1
      %p29 = por %p27, %p28
      %p30 = scmp.ne.s32.totalorder %s21, %s22
      %p31 = scmp.eq.s32.totalorder %s16, 0
      %p32 = por %p30, %p31
      %p33 = scmp.ne.s32.totalorder %s21, %s22
      %p34 = scmp.eq.s32.totalorder %s17, 1
      %p35 = por %p33, %p34
      %p37 = scmp.ne.s32.totalorder %s22, %s36
      %p38 = scmp.eq.s32.totalorder %s17, 0
      %p39 = por %p37, %p38
      %s40 = ssub.s32 %s11, %s18
      %p41 = scmp.eq.s32.totalorder %s40, 0
      %s43 = sadd.s32 %s42, 1
      %s44 = scalar_select %p41, %s42, %s43
      %p47 = pneg %p41
      %p48 = scmp.eq.s32.totalorder %s11, 1
      %p49 = por %p47, %p48
      %p50 = scmp.ne.s32.totalorder %s42, %s45
      %p51 = scmp.eq.s32.totalorder %s11, 0
      %p52 = por %p50, %p51
      %p53 = scmp.ne.s32.totalorder %s42, %s45
      %p54 = scmp.eq.s32.totalorder %s16, 1
      %p55 = por %p53, %p54
      %p56 = scmp.ne.s32.totalorder %s45, %s46
      %p57 = scmp.eq.s32.totalorder %s16, 0
      %p58 = por %p56, %p57
      %p59 = scmp.ne.s32.totalorder %s45, %s46
      %p60 = scmp.eq.s32.totalorder %s17, 1
      %p61 = por %p59, %p60
      %p63 = scmp.ne.s32.totalorder %s46, %s62
      %p64 = scmp.eq.s32.totalorder %s17, 0
      %p65 = por %p63, %p64
      %s66 = ssub.s32 %s11, %s18
      %p67 = scmp.eq.s32.totalorder %s66, 0
      %s69 = sadd.s32 %s68, 1
      %s70 = scalar_select %p67, %s68, %s69
      %p73 = pneg %p67
      %p74 = scmp.eq.s32.totalorder %s11, 1
      %p75 = por %p73, %p74
      %p76 = scmp.ne.s32.totalorder %s68, %s71
      %p77 = scmp.eq.s32.totalorder %s11, 0
      %p78 = por %p76, %p77
      %p79 = scmp.ne.s32.totalorder %s68, %s71
      %p80 = scmp.eq.s32.totalorder %s16, 1
      %p81 = por %p79, %p80
      %p82 = scmp.ne.s32.totalorder %s71, %s72
      %p83 = scmp.eq.s32.totalorder %s16, 0
      %p84 = por %p82, %p83
      %p85 = scmp.ne.s32.totalorder %s71, %s72
      %p86 = scmp.eq.s32.totalorder %s17, 1
      %p87 = por %p85, %p86
      %p89 = scmp.ne.s32.totalorder %s72, %s88
      %p90 = scmp.eq.s32.totalorder %s17, 0
      %p91 = por %p89, %p90
      %s92 = ssub.s32 %s11, %s18
      %p93 = scmp.eq.s32.totalorder %s92, 0
      %s95 = sadd.s32 %s94, 1
      %s96 = scalar_select %p93, %s94, %s95
      %p99 = pneg %p93
      %p100 = scmp.eq.s32.totalorder %s11, 1
      %p101 = por %p99, %p100
      %p102 = scmp.ne.s32.totalorder %s94, %s97
      %p103 = scmp.eq.s32.totalorder %s11, 0
      %p104 = por %p102, %p103
      %p105 = scmp.ne.s32.totalorder %s94, %s97
      %p106 = scmp.eq.s32.totalorder %s16, 1
      %p107 = por %p105, %p106
      %p108 = scmp.ne.s32.totalorder %s97, %s98
      %p109 = scmp.eq.s32.totalorder %s16, 0
      %p110 = por %p108, %p109
      %p111 = scmp.ne.s32.totalorder %s97, %s98
      %p112 = scmp.eq.s32.totalorder %s17, 1
      %p113 = por %p111, %p112
      %p115 = scmp.ne.s32.totalorder %s98, %s114
      %p116 = scmp.eq.s32.totalorder %s17, 0
      %p117 = por %p115, %p116
      %s118 = ssub.s32 %s11, %s18
      %p119 = scmp.eq.s32.totalorder %s118, 0
      %s121 = sadd.s32 %s120, 1
      %s122 = scalar_select %p119, %s120, %s121
      %p125 = pneg %p119
      %p126 = scmp.eq.s32.totalorder %s11, 1
      %p127 = por %p125, %p126
      %p128 = scmp.ne.s32.totalorder %s120, %s123
      %p129 = scmp.eq.s32.totalorder %s11, 0
      %p130 = por %p128, %p129
      %p131 = scmp.ne.s32.totalorder %s120, %s123
      %p132 = scmp.eq.s32.totalorder %s16, 1
      %p133 = por %p131, %p132
      %p134 = scmp.ne.s32.totalorder %s123, %s124
      %p135 = scmp.eq.s32.totalorder %s16, 0
      %p136 = por %p134, %p135
      %p137 = scmp.ne.s32.totalorder %s123, %s124
      %p138 = scmp.eq.s32.totalorder %s17, 1
      %p139 = por %p137, %p138
      %p141 = scmp.ne.s32.totalorder %s124, %s140
      %p142 = scmp.eq.s32.totalorder %s17, 0
      %p143 = por %p141, %p142
      %p144 = scmp.le.s32.totalorder 1, %s11
      %p145 = scmp.lt.s32.totalorder %s11, 3
      %p146 = pnand %p144, %p145
      %p147 = pneg %p146
      // Predicated region
      $region9: #{cnn_block.2} parent=5 // pred_check
        _
      $region10: #{cnn_block.2} parent=5 // pred_check_branch
        %149 = sbr.rel (%p146) target = $region12
      $region11: #{cnn_block.2} parent=5 // pred_region
        %s150 = ssub.s32 %s11, 1
        // Predicated region
        $region13: #{cnn_block.2} parent=11 // pred_check
          %p151 = pneg %p32
        $region14: #{cnn_block.2} parent=11 // pred_check_branch
          %153 = sbr.rel (%p151) target = $region16
        $region15: #{cnn_block.2} parent=11 // pred_region
          _
        $region16: #{cnn_block.2} parent=11 // pred_fallthru
          _
      $region12: #{cnn_block.2} parent=5 // pred_fallthru
        _
      %p154 = scmp.lt.s32.totalorder %s11, 2
      // Predicated region
      $region17: #{cnn_block.2} parent=5 // pred_check
        %p155 = pneg %p154
      $region18: #{cnn_block.2} parent=5 // pred_check_branch
        %157 = sbr.rel (%p155) target = $region20
      $region19: #{cnn_block.2} parent=5 // pred_region
        // Predicated region
        $region21: #{cnn_block.2} parent=19 // pred_check
          %p158 = pneg %p52
        $region22: #{cnn_block.2} parent=19 // pred_check_branch
          %160 = sbr.rel (%p158) target = $region24
        $region23: #{cnn_block.2} parent=19 // pred_region
          %s161 = sand.u32 %s42, 1
          %s162 = sand.u32 %s42, 1
          %s163 = smul.addr %s162, 80
          %s164 = scalar_lea.vmem [#allocation2], %s163
          %s165 = smul.u32 2, %s11
          %s166 = smul.addr %s165, 8
          %s167 = scalar_lea.vmem %s1, %s166
          // Predicated region
          $region25: #{cnn_block.2} parent=23 // pred_check
            _
          $region26: #{cnn_block.2} parent=23 // pred_check_branch
            %169 = sbr.rel (0) target = $region28
          $region27: #{cnn_block.2} parent=23 // pred_region
            // Predicated region
            $region29: #{cnn_block.2} parent=27 // pred_check
              _
            $region30: #{cnn_block.2} parent=27 // pred_check_branch
              %171 = sbr.rel (0) target = $region32
            $region31: #{cnn_block.2} parent=27 // pred_region
              loop: start=0, step=1, limit=1
              $region33: #{cnn_block.2} parent=31 // loop_pre_header
                _
              $region34: #{cnn_block.2} parent=31 // loop_header
                %s173 = sphi 0, %s177
                %p174 = scmp.ge.s32.totalorder %s173, 1
                %s178 = sphi %s167, %s167
                %s179 = sphi %s164, %s164
              $region35: #{cnn_block.2} parent=31 // loop_header_branch
                %176 = sbr.rel (%p174) target = $region39
              $region36: #{cnn_block.2} parent=31 // loop_body
                %v180 = vld [vmem:[%s178] sm:$0xff]
                %181 = vst [vmem:[%s179] sm:$0xff] %v180
                %v182 = vld [vmem:[%s178 + $0x8] sm:$0xff]
                %183 = vst [vmem:[%s179 + $0x8] sm:$0xff] %v182
                %v184 = vld [vmem:[%s178 + $0x20] sm:$0xff]
                %185 = vst [vmem:[%s179 + $0x10] sm:$0xff] %v184
                %v186 = vld [vmem:[%s178 + $0x28] sm:$0xff]
                %187 = vst [vmem:[%s179 + $0x18] sm:$0xff] %v186
                %v188 = vld [vmem:[%s178 + $0x40] sm:$0xff]
                %189 = vst [vmem:[%s179 + $0x20] sm:$0xff] %v188
                %v190 = vld [vmem:[%s178 + $0x48] sm:$0xff]
                %191 = vst [vmem:[%s179 + $0x28] sm:$0xff] %v190
                %v192 = vld [vmem:[%s178 + $0x60] sm:$0xff]
                %193 = vst [vmem:[%s179 + $0x30] sm:$0xff] %v192
                %v194 = vld [vmem:[%s178 + $0x68] sm:$0xff]
                %195 = vst [vmem:[%s179 + $0x38] sm:$0xff] %v194
                %v196 = vld [vmem:[%s178 + $0x80] sm:$0xff]
                %197 = vst [vmem:[%s179 + $0x40] sm:$0xff] %v196
                %v198 = vld [vmem:[%s178 + $0x88] sm:$0xff]
                %199 = vst [vmem:[%s179 + $0x48] sm:$0xff] %v198
              $region37: #{cnn_block.2} parent=31 // loop_footer
                %s177 = sadd.s32 1, %s173
              $region38: #{cnn_block.2} parent=31 // loop_footer_branch
                %172 = sbr.rel target = $region34
              $region39: #{cnn_block.2} parent=31 // loop_exit
                _
            $region32: #{cnn_block.2} parent=27 // pred_fallthru
              _
            // Predicated region
            $region40: #{cnn_block.2} parent=27 // pred_check
              _
            $region41: #{cnn_block.2} parent=27 // pred_check_branch
              %201 = sbr.rel target = $region43
            $region42: #{cnn_block.2} parent=27 // pred_region
              _
            $region43: #{cnn_block.2} parent=27 // pred_fallthru
              _
          $region28: #{cnn_block.2} parent=23 // pred_fallthru
            _
          %202 = vnop
        $region24: #{cnn_block.2} parent=19 // pred_fallthru
          _
      $region20: #{cnn_block.2} parent=5 // pred_fallthru
        _
      %p203 = scmp.le.s32.totalorder 1, %s11
      %p204 = scmp.lt.s32.totalorder %s11, 3
      %p205 = pnand %p203, %p204
      %p206 = pneg %p205
      // Predicated region
      $region44: #{cnn_block.2} parent=5 // pred_check
        _
      $region45: #{cnn_block.2} parent=5 // pred_check_branch
        %208 = sbr.rel (%p205) target = $region47
      $region46: #{cnn_block.2} parent=5 // pred_region
        %s209 = ssub.s32 %s11, 1
        %s210 = sand.u32 %s45, 1
        %s211 = sand.u32 %s45, 1
        %s212 = smul.addr %s211, 80
        %s213 = scalar_lea.vmem [#allocation2], %s212
        // Predicated region
        $region48: #{cnn_block.2} parent=46 // pred_check
          %p214 = pneg %p58
        $region49: #{cnn_block.2} parent=46 // pred_check_branch
          %216 = sbr.rel (%p214) target = $region51
        $region50: #{cnn_block.2} parent=46 // pred_region
          _
        $region51: #{cnn_block.2} parent=46 // pred_fallthru
          _
        %p217 = pneg %p32
        %p218 = pneg %p29
        %s219 = sand.u32 %s45, 1
        %s220 = sand.u32 %s45, 1
        %s221 = smul.addr %s220, 80
        %s222 = scalar_lea.vmem [#allocation2], %s221
        %p223 = pneg %p58
        %p224 = pneg %p55
        %p225 = pneg %p84
        %p226 = pneg %p81
        %s227 = smul.u32 2, %s16
        %p228 = scmp.lt.s32.totalorder %s227, 3
        %s229 = scalar_select %p228, %s227, 3
        %s230 = smul.addr %s229, 8
        %s231 = scalar_lea.vmem %s2, %s230
        %p232 = pneg %p110
        %p233 = pneg %p107
        %p234 = scmp.lt.s32.totalorder %s16, 1
        %s235 = scalar_select %p234, %s16, 1
        %s236 = smul.addr %s235, 8
        %s237 = scalar_lea.vmem %s3, %s236
        %p238 = pneg %p136
        %p239 = pneg %p133
        %p240 = scmp.lt.s32.totalorder %s16, 1
        %s241 = scalar_select %p240, %s16, 1
        %s242 = smul.addr %s241, 8
        %s243 = scalar_lea.vmem %s4, %s242
        %s244 = smul.u32 2, %s16
        %s245 = smul.u32 2, %s16
        %p246 = scmp.lt.s32.totalorder %s245, 3
        %s247 = scalar_select %p246, %s245, 3
        %s248 = smul.addr %s247, 8
        %s249 = scalar_lea.vmem %s2, %s248
        %s250 = smul.u32 2, %s16
        %p251 = scmp.lt.s32.totalorder %s16, 1
        %s252 = scalar_select %p251, %s16, 1
        %s253 = smul.addr %s252, 8
        %s254 = scalar_lea.vmem %s3, %s253
        %p255 = scmp.lt.s32.totalorder %s16, 1
        %s256 = scalar_select %p255, %s16, 1
        %s257 = smul.addr %s256, 8
        %s258 = scalar_lea.vmem %s4, %s257
        %v259 = vld [vmem:[%s0] sm:$0xff]
        %v260 = vld [vmem:[%s213] sm:$0xff]
        %v261 = vld [vmem:[%s213 + $0x8] sm:$0xff]
        %v262 = vld [vmem:[%s213 + $0x10] sm:$0xff]
        %v263 = vld [vmem:[%s213 + $0x18] sm:$0xff]
        %v264 = vld [vmem:[%s213 + $0x20] sm:$0xff]
        %v265 = vld [vmem:[%s213 + $0x28] sm:$0xff]
        %v266 = vld [vmem:[%s213 + $0x30] sm:$0xff]
        %v267 = vld [vmem:[%s213 + $0x38] sm:$0xff]
        %v268 = vld [vmem:[%s213 + $0x40] sm:$0xff]
        %v269 = vld [vmem:[%s213 + $0x48] sm:$0xff]
        %vm270 = vcmask 326656
        %v272 = vsel %vm270, %v259, 0
        %274 = vmatprep.subr.mxu0 0.0
        %275 = vmatpush1.msra.mxu0 0.0
        %276 = vmatprep.subr.mxu0 0.0
        %277 = vmatpush1.msra.mxu0 0.0
        %278 = vmatprep.subr.mxu0 0.0
        %279 = vmatpush1.msra.mxu0 0.0
        %280 = vmatprep.subr.mxu0 0.0
        %281 = vmatpush1.msra.mxu0 0.0
        %282 = vmatprep.subr.mxu0 0.0
        %283 = vmatpush1.msra.mxu0 0.0
        %284 = vmatprep.subr.mxu0 0.0
        %285 = vmatpush1.msra.mxu0 0.0
        %286 = vmatprep.subr.mxu0 0.0
        %287 = vmatpush1.msra.mxu0 0.0
        %288 = vmatprep.subr.mxu0 0.0
        %289 = vmatpush1.msra.mxu0 0.0
        %290 = vmatprep.subr.mxu0 0.0
        %291 = vmatpush1.msra.mxu0 0.0
        %292 = vmatprep.subr.mxu0 0.0
        %293 = vmatpush1.msra.mxu0 0.0
        %294 = vmatprep.subr.mxu0 0.0
        %295 = vmatpush1.msra.mxu0 0.0
        %296 = vmatprep.subr.mxu0 %v269
        %297 = vmatpush1.msra.mxu0 %v268
        %298 = vmatprep.subr.mxu0 %v267
        %299 = vmatpush1.msra.mxu0 %v266
        %300 = vmatprep.subr.mxu0 %v265
        %301 = vmatpush1.msra.mxu0 %v264
        %302 = vmatprep.subr.mxu0 %v263
        %303 = vmatpush1.msra.mxu0 %v262
        %304 = vmatprep.subr.mxu0 %v261
        %305 = vmatpush1.msra.mxu0 %v260
        %306 = vmatprep.subr.mxu0 0.0
        %307 = vmatpush2.msra.mxu0 0.0
        %308 = vmatprep.subr.mxu0 0.0
        %309 = vmatpush2.msra.mxu0 0.0
        %310 = vmatprep.subr.mxu0 0.0
        %311 = vmatpush2.msra.mxu0 0.0
        %312 = vmatprep.subr.mxu0 0.0
        %313 = vmatpush2.msra.mxu0 0.0
        %314 = vmatprep.subr.mxu0 0.0
        %315 = vmatpush2.msra.mxu0 0.0
        %316 = vmatprep.subr.mxu0 0.0
        %317 = vmatpush2.msra.mxu0 0.0
        %318 = vmatprep.subr.mxu0 0.0
        %319 = vmatpush2.msra.mxu0 0.0
        %320 = vmatprep.subr.mxu0 0.0
        %321 = vmatpush2.msra.mxu0 0.0
        %322 = vmatprep.subr.mxu0 0.0
        %323 = vmatpush2.msra.mxu0 0.0
        %324 = vmatprep.subr.mxu0 0.0
        %325 = vmatpush2.msra.mxu0 0.0
        %326 = vmatprep.subr.mxu0 0.0
        %327 = vmatpush2.msra.mxu0 0.0
        %328 = vmatprep.subr.mxu0 0.0
        %329 = vmatpush2.msra.mxu0 0.0
        %330 = vmatprep.subr.mxu0 0.0
        %331 = vmatpush2.msra.mxu0 0.0
        %332 = vmatprep.subr.mxu0 0.0
        %333 = vmatpush2.msra.mxu0 0.0
        %334 = vmatprep.subr.mxu0 0.0
        %335 = vmatpush2.msra.mxu0 0.0
        %336 = vmatprep.subr.mxu0 0.0
        %337 = vmatpush2.msra.mxu0 0.0
        %338 = vmatprep.mubr.f32.mxu0 0.0
        %339 = vmatmul.mubr.f32.gmra.mxu0 %v272
        %v340 = vpop.f32.mrf.mxu0
        %v341 = vadd.f32 0.0, %v340
        %v342 = vpop.f32.mrf.mxu0
        %v343 = vadd.f32 0.0, %v342
        %344 = vdwg.mxu0
        %345 = vst [vmem:[%s249] sm:$0xff] %v341
        %346 = vst [vmem:[%s249 + $0x8] sm:$0xff] %v343
        %v347 = vadd.f32 %v341, %v343
        %348 = vadd.xlane.f32.xlu0 %v347
        %v349 = vpop.xlane.xlu0 %348
        %vm350 = vcmask 7168
        %351 = vst.msk [vmem:[%s254] sm:$0xff] %vm350, %v349
        %v352 = vmul.f32 %v341, %v341
        %v353 = vmul.f32 %v343, %v343
        %v354 = vadd.f32 %v352, %v353
        %355 = vadd.xlane.f32.xlu0 %v354
        %v356 = vpop.xlane.xlu0 %355
        %357 = vst.msk [vmem:[%s258] sm:$0xff] %vm350, %v356
        %s358 = smul.u32 2, %s16
        %p359 = scmp.lt.s32.totalorder %s358, 3
        %s360 = scalar_select %p359, %s358, 3
        %s361 = smul.addr %s360, 8
        %s362 = scalar_lea.vmem %s2, %s361
        %p363 = scmp.lt.s32.totalorder %s16, 1
        %s364 = scalar_select %p363, %s16, 1
        %s365 = smul.addr %s364, 8
        %s366 = scalar_lea.vmem %s3, %s365
        %p367 = scmp.lt.s32.totalorder %s16, 1
        %s368 = scalar_select %p367, %s16, 1
        %s369 = smul.addr %s368, 8
        %s370 = scalar_lea.vmem %s4, %s369
        // Predicated region
        $region52: #{cnn_block.2} parent=46 // pred_check
          %p371 = pneg %p81
        $region53: #{cnn_block.2} parent=46 // pred_check_branch
          %373 = sbr.rel (%p371) target = $region55
        $region54: #{cnn_block.2} parent=46 // pred_region
          %s374 = smul.u32 2, %s16
        $region55: #{cnn_block.2} parent=46 // pred_fallthru
          _
        // Predicated region
        $region56: #{cnn_block.2} parent=46 // pred_check
          %p375 = pneg %p107
        $region57: #{cnn_block.2} parent=46 // pred_check_branch
          %377 = sbr.rel (%p375) target = $region59
        $region58: #{cnn_block.2} parent=46 // pred_region
          _
        $region59: #{cnn_block.2} parent=46 // pred_fallthru
          _
        // Predicated region
        $region60: #{cnn_block.2} parent=46 // pred_check
          %p378 = pneg %p133
        $region61: #{cnn_block.2} parent=46 // pred_check_branch
          %380 = sbr.rel (%p378) target = $region63
        $region62: #{cnn_block.2} parent=46 // pred_region
          _
        $region63: #{cnn_block.2} parent=46 // pred_fallthru
          _
      $region47: #{cnn_block.2} parent=5 // pred_fallthru
        _
      %p381 = scmp.le.s32.totalorder 2, %s11
      // Predicated region
      $region64: #{cnn_block.2} parent=5 // pred_check
        %p382 = pneg %p381
      $region65: #{cnn_block.2} parent=5 // pred_check_branch
        %384 = sbr.rel (%p382) target = $region67
      $region66: #{cnn_block.2} parent=5 // pred_region
        %s385 = ssub.s32 %s11, 2
        // Predicated region
        $region68: #{cnn_block.2} parent=66 // pred_check
          %p386 = pneg %p87
        $region69: #{cnn_block.2} parent=66 // pred_check_branch
          %388 = sbr.rel (%p386) target = $region71
        $region70: #{cnn_block.2} parent=66 // pred_region
          %s389 = smul.u32 2, %s17
          %p390 = scmp.lt.s32.totalorder %s389, 3
          %s391 = scalar_select %p390, %s389, 3
          %s392 = smul.addr %s391, 8
          %s393 = scalar_lea.vmem %s2, %s392
        $region71: #{cnn_block.2} parent=66 // pred_fallthru
          _
        // Predicated region
        $region72: #{cnn_block.2} parent=66 // pred_check
          %p394 = pneg %p113
        $region73: #{cnn_block.2} parent=66 // pred_check_branch
          %396 = sbr.rel (%p394) target = $region75
        $region74: #{cnn_block.2} parent=66 // pred_region
          %p397 = scmp.lt.s32.totalorder %s17, 1
          %s398 = scalar_select %p397, %s17, 1
          %s399 = smul.addr %s398, 8
          %s400 = scalar_lea.vmem %s3, %s399
        $region75: #{cnn_block.2} parent=66 // pred_fallthru
          _
        // Predicated region
        $region76: #{cnn_block.2} parent=66 // pred_check
          %p401 = pneg %p139
        $region77: #{cnn_block.2} parent=66 // pred_check_branch
          %403 = sbr.rel (%p401) target = $region79
        $region78: #{cnn_block.2} parent=66 // pred_region
          %p404 = scmp.lt.s32.totalorder %s17, 1
          %s405 = scalar_select %p404, %s17, 1
          %s406 = smul.addr %s405, 8
          %s407 = scalar_lea.vmem %s4, %s406
        $region79: #{cnn_block.2} parent=66 // pred_fallthru
          _
      $region67: #{cnn_block.2} parent=5 // pred_fallthru
        _
    $region6: #{cnn_block.2} parent=1 // loop_footer
      %s15 = sadd.s32 1, %s11
    $region7: #{cnn_block.2} parent=1 // loop_footer_branch
      %10 = sbr.rel target = $region3
    $region8: #{cnn_block.2} parent=1 // loop_exit
      _

</llo_original>
